<compile_context>
chip_gen: v7x
topology: tpu7x:2x2x1
jax: 0.10.0
libtpu: 0.0.40
codegen_flags: <defaults>
</compile_context>

<pallas_src>
import functools
import math

import numpy as np
import jax
import jax.numpy as jnp
from jax.experimental import pallas as pl
from jax.experimental.pallas import tpu as pltpu


# ---------------------------------------------------------------------------
# librosa.filters.mel reimplemented in numpy (Slaney mel scale + 'slaney' norm,
# librosa defaults used by LogMel_default with htk=False).  Host-side constant.
# ---------------------------------------------------------------------------
def _hz_to_mel(freq, htk=False):
    freq = np.asarray(freq, dtype=np.float64)
    if htk:
        return 2595.0 * np.log10(1.0 + freq / 700.0)
    f_sp = 200.0 / 3
    min_log_hz = 1000.0
    min_log_mel = min_log_hz / f_sp
    logstep = np.log(6.4) / 27.0
    lin = freq / f_sp
    log_part = min_log_mel + np.log(np.maximum(freq, 1e-12) / min_log_hz) / logstep
    return np.where(freq >= min_log_hz, log_part, lin)


def _mel_to_hz(mels, htk=False):
    mels = np.asarray(mels, dtype=np.float64)
    if htk:
        return 700.0 * (10.0 ** (mels / 2595.0) - 1.0)
    f_sp = 200.0 / 3
    min_log_hz = 1000.0
    min_log_mel = min_log_hz / f_sp
    logstep = np.log(6.4) / 27.0
    lin = f_sp * mels
    log_part = min_log_hz * np.exp(logstep * (mels - min_log_mel))
    return np.where(mels >= min_log_mel, log_part, lin)


def mel_filterbank(sr=16000, n_fft=512, n_mels=80, fmin=0.0, fmax=None, htk=False):
    """Equivalent of librosa.filters.mel(sr, n_fft, n_mels, fmin, fmax, htk)."""
    if fmax is None:
        fmax = sr / 2.0
    n_freq = 1 + n_fft // 2
    fftfreqs = np.linspace(0.0, sr / 2.0, n_freq)
    mel_pts = np.linspace(_hz_to_mel(fmin, htk), _hz_to_mel(fmax, htk), n_mels + 2)
    mel_f = _mel_to_hz(mel_pts, htk)
    fdiff = np.diff(mel_f)
    ramps = mel_f[:, None] - fftfreqs[None, :]
    lower = -ramps[:-2] / fdiff[:-1, None]
    upper = ramps[2:] / fdiff[1:, None]
    weights = np.maximum(0.0, np.minimum(lower, upper))
    enorm = 2.0 / (mel_f[2:n_mels + 2] - mel_f[:n_mels])    # slaney norm
    weights *= enorm[:, None]
    return weights.astype(np.float32)                       # (n_mels, n_freq)


# ---------------------------------------------------------------------------
# Tiling choice: (batches-per-step, frames-per-step)
# ---------------------------------------------------------------------------
def _round_up(x, m):
    return ((x + m - 1) // m) * m


def _choose_tiles(B, T):
    if T > 256:
        # Large T: one batch row per step, wide (HBM-roofline friendly) time tiles.
        bb = 1
        tt = 512 if T <= 4096 else 1024
        if tt >= T:
            tt = T                                     # full dim (exempt from x8 rule)
    else:
        # Small T: take the whole time axis and pack several batch rows per step so
        # each grid step moves >= ~256 frames (amortizes ~0.35us/step overhead and
        # fills the MXU M dimension).  Only pack when T is sublane aligned so the
        # (bb, T, K) -> (bb*T, K) collapse is a free, layout-preserving reshape.
        tt = T
        bb = min(B, -(-256 // T)) if (T % 8 == 0) else 1
        bb = max(bb, 1)
    # Megacore (v7x has 2 TensorCores): keep the parallel grid at >= 2 steps.
    if (-(-B // bb)) * (-(-T // tt)) < 2:
        if B >= 2:
            bb = -(-B // 2)
        elif T >= 16:
            half = _round_up(-(-T // 2), 8)
            if half < T:
                tt = half
    return bb, tt


# ---------------------------------------------------------------------------
# In-kernel matmul + clamp + log.  Mosaic's dot only exposes DEFAULT (1 bf16
# pass) / HIGHEST (fp32, 6 passes); "high" emulates bf16_3x with 3 bf16 passes.
# ---------------------------------------------------------------------------
def _mxu_matmul(x_f32, w_f32, precision):
    if precision == "highest":
        return jnp.dot(x_f32, w_f32, preferred_element_type=jnp.float32,
                       precision=jax.lax.Precision.HIGHEST)
    if precision == "default":                          # 1 bf16 pass (v7x roofline)
        return jnp.dot(x_f32.astype(jnp.bfloat16), w_f32.astype(jnp.bfloat16),
                       preferred_element_type=jnp.float32)
    # "high": 3-pass bf16 split (x_hi+x_lo)@(w_hi+w_lo), dropping the lo*lo term.
    x_hi = x_f32.astype(jnp.bfloat16)
    x_lo = (x_f32 - x_hi.astype(jnp.float32)).astype(jnp.bfloat16)
    w_hi = w_f32.astype(jnp.bfloat16)
    w_lo = (w_f32 - w_hi.astype(jnp.float32)).astype(jnp.bfloat16)
    acc = jnp.dot(x_hi, w_hi, preferred_element_type=jnp.float32)
    acc = acc + jnp.dot(x_hi, w_lo, preferred_element_type=jnp.float32)
    acc = acc + jnp.dot(x_lo, w_hi, preferred_element_type=jnp.float32)
    return acc


def _matmul_logmel(feat_ref, mel_ref, *, bb, tt, log_scale, precision):
    """Returns log-mel of the current block as a 2-D (bb*tt, n_mels) value."""
    if bb == 1:
        x = feat_ref[0]                                 # (tt, K)
    else:
        # tt % 8 == 0 guaranteed by _choose_tiles -> free leading-dim collapse.
        x = feat_ref[...].reshape(bb * tt, feat_ref.shape[-1])
    x = x.astype(jnp.float32)
    mel = _mxu_matmul(x, mel_ref[...], precision)
    mel = jnp.maximum(mel, 1e-10)                       # torch.clamp(min=1e-10)
    logmel = jnp.log(mel)
    if log_scale != 1.0:                                # log_base handling
        logmel = logmel * log_scale
    return logmel


def _logmel_kernel(feat_ref, mel_ref, out_ref, *, bb, tt, log_scale, precision):
    """No-ilens variant: no pad-mask work at all."""
    logmel = _matmul_logmel(feat_ref, mel_ref, bb=bb, tt=tt,
                            log_scale=log_scale, precision=precision)
    for i in range(bb):
        out_ref[i] = logmel[i * tt:(i + 1) * tt]


def _logmel_kernel_masked(ilens_ref, feat_ref, mel_ref, out_ref, *,
                          bb, tt, log_scale, precision, n_batch):
    """ilens variant: zero-fill frames >= ilens[b]; mask only on boundary tiles."""
    logmel = _matmul_logmel(feat_ref, mel_ref, bb=bb, tt=tt,
                            log_scale=log_scale, precision=precision)
    b0 = pl.program_id(0) * bb
    t0 = pl.program_id(1) * tt
    # ilens values for the bb batches covered by this block (clamped for the
    # ragged last batch block -- its rows are dropped by the masked write anyway).
    lens = [ilens_ref[jnp.minimum(b0 + i, n_batch - 1)] for i in range(bb)]
    min_len = lens[0]
    for l in lens[1:]:
        min_len = jnp.minimum(min_len, l)

    @pl.when(min_len >= t0 + tt)                        # fully-valid tile: plain store
    def _():
        for i in range(bb):
            out_ref[i] = logmel[i * tt:(i + 1) * tt]

    @pl.when(min_len < t0 + tt)                         # boundary tile: zero-fill
    def _():
        n_mels = out_ref.shape[-1]
        frame = t0 + jax.lax.broadcasted_iota(jnp.int32, (tt, n_mels), 0)
        for i in range(bb):
            out_ref[i] = jnp.where(frame < lens[i],
                                   logmel[i * tt:(i + 1) * tt], 0.0)


# ---------------------------------------------------------------------------
# Wrapper
# ---------------------------------------------------------------------------
def logmel_default_forward(feat, melmat_t, ilens=None, log_base=None,
                           precision="high"):
    """JAX/Pallas equivalent of espnet2 LogMel_default.forward.

    feat:     (B, T, n_freq) float32 or bfloat16
    melmat_t: (n_freq, n_mels) float32 (librosa mel matrix, transposed)
    precision: "high" (3 bf16 passes, ~f32; default) | "highest" | "default"
    returns: (logmel_feat (B, T, n_mels) float32, ilens (B,) int32)
    """
    assert precision in ("default", "high", "highest")
    melmat_t = jnp.asarray(melmat_t, jnp.float32)
    feat = jnp.asarray(feat)
    if feat.dtype not in (jnp.float32, jnp.bfloat16):
        feat = feat.astype(jnp.float32)
    B, T, F = feat.shape
    Fm, n_mels = melmat_t.shape
    assert F == Fm, (F, Fm)

    if log_base is None:
        log_scale = 1.0
    else:
        log_scale = 1.0 / math.log(float(log_base))

    # Trim the all-zero Nyquist row so the contraction K is a lane-exact 256
    # (avoids MXU K padding 257->512).  Done purely via the BlockSpec K width --
    # no wrapper-side slice copy.  Gated on the row actually being ~zero.
    Kc = F
    if F > 1 and (F - 1) % 128 == 0 and F % 128 != 0:
        try:
            last_row = np.asarray(melmat_t[F - 1])
            if float(np.max(np.abs(last_row))) < 1e-6:
                Kc = F - 1
        except Exception:                               # tracer -> can't inspect
            pass

    bb, tt = _choose_tiles(B, T)
    grid = (pl.cdiv(B, bb), pl.cdiv(T, tt))
    out_shape = jax.ShapeDtypeStruct((B, T, n_mels), jnp.float32)
    cparams = pltpu.CompilerParams(
        dimension_semantics=("parallel", "parallel"))   # megacore on v7x

    if ilens is None:
        kernel = functools.partial(_logmel_kernel, bb=bb, tt=tt,
                                   log_scale=log_scale, precision=precision)
        logmel = pl.pallas_call(
            kernel,
            out_shape=out_shape,
            grid_spec=pltpu.PrefetchScalarGridSpec(
                num_scalar_prefetch=0,
                grid=grid,
                in_specs=[
                    pl.BlockSpec((bb, tt, Kc), lambda b, t: (b, t, 0)),
                    pl.BlockSpec((Kc, n_mels), lambda b, t: (0, 0)),  # VMEM resident
                ],
                out_specs=pl.BlockSpec((bb, tt, n_mels), lambda b, t: (b, t, 0)),
            ),
            compiler_params=cparams,
        )(feat, melmat_t)
        out_ilens = jnp.full((B,), T, dtype=jnp.int32)
    else:
        ilens_i32 = jnp.asarray(ilens, jnp.int32)
        kernel = functools.partial(_logmel_kernel_masked, bb=bb, tt=tt,
                                   log_scale=log_scale, precision=precision,
                                   n_batch=B)
        logmel = pl.pallas_call(
            kernel,
            out_shape=out_shape,
            grid_spec=pltpu.PrefetchScalarGridSpec(
                num_scalar_prefetch=1,                  # ilens -> SMEM
                grid=grid,
                in_specs=[
                    pl.BlockSpec((bb, tt, Kc), lambda b, t, il: (b, t, 0)),
                    pl.BlockSpec((Kc, n_mels), lambda b, t, il: (0, 0)),
                ],
                out_specs=pl.BlockSpec((bb, tt, n_mels), lambda b, t, il: (b, t, 0)),
            ),
            compiler_params=cparams,
        )(ilens_i32, feat, melmat_t)
        out_ilens = ilens_i32

    # torch returns int64 lens; jax default x64 is off -> int32.
    return logmel, out_ilens


if __name__ == "__main__":
    key = jax.random.PRNGKey(0)
    fs, n_fft, n_mels = 16000, 512, 80
    F = n_fft // 2 + 1                                   # 257

    melmat = mel_filterbank(sr=fs, n_fft=n_fft, n_mels=n_mels,
                            fmin=0.0, fmax=fs / 2.0, htk=False)
    melmat_t = jnp.asarray(melmat.T)                     # (257, 80)

    def ref_logmel(x):
        mel = jnp.einsum("btf,fm->btm", x, melmat_t,
                         precision=jax.lax.Precision.HIGHEST)
        return jnp.log(jnp.maximum(mel, 1e-10))

    k1, k2 = jax.random.split(key)

    # --- test 1: default path (ilens=None, natural log), B=2, T=24 -----------
    B, T = 2, 24
    feat = jax.random.uniform(k1, (B, T, F), jnp.float32, 0.0, 4.0)
    logmel, olens = logmel_default_forward(feat, melmat_t)
    jax.block_until_ready((logmel, olens))
    ref = ref_logmel(feat)
    assert logmel.shape == (B, T, n_mels), logmel.shape
    assert olens.shape == (B,) and int(olens[0]) == T and int(olens[1]) == T
    assert bool(jnp.all(jnp.isfinite(logmel)))
    np.testing.assert_allclose(np.asarray(logmel), np.asarray(ref),
                               rtol=2e-4, atol=2e-4)

    # --- test 2: ilens-masking path ------------------------------------------
    ilens = jnp.array([T, T - 7], dtype=jnp.int32)
    logmel_m, olens_m = logmel_default_forward(feat, melmat_t, ilens=ilens)
    jax.block_until_ready((logmel_m, olens_m))
    assert bool(jnp.all(logmel_m[1, T - 7:, :] == 0.0))
    np.testing.assert_allclose(np.asarray(logmel_m[0]), np.asarray(ref[0]),
                               rtol=2e-4, atol=2e-4)
    np.testing.assert_allclose(np.asarray(logmel_m[1, :T - 7]),
                               np.asarray(ref[1, :T - 7]), rtol=2e-4, atol=2e-4)

    # --- test 3: batch-packed path (bb > 1), ilens + log_base=10 -------------
    B3 = 8
    feat3 = jax.random.uniform(k2, (B3, T, F), jnp.float32, 0.0, 4.0)
    ilens3 = jnp.array([24, 17, 24, 8, 24, 5, 24, 24], dtype=jnp.int32)
    logmel3, olens3 = logmel_default_forward(feat3, melmat_t, ilens=ilens3,
                                             log_base=10.0)
    jax.block_until_ready((logmel3, olens3))
    ref3 = ref_logmel(feat3) / math.log(10.0)
    mask3 = jnp.arange(T)[None, :, None] < ilens3[:, None, None]
    ref3 = jnp.where(mask3, ref3, 0.0)
    assert olens3.shape == (B3,)
    np.testing.assert_allclose(np.asarray(logmel3), np.asarray(ref3),
                               rtol=2e-4, atol=2e-4)

    print("KERNEL_OK")
</pallas_src>

<mosaic_0001>
module attributes {stable_mosaic.version = 11 : i64} {
  func.func @_logmel_kernel(%arg0: i32, %arg1: i32, %arg2: memref<1x24x256xf32, #tpu.memory_space<vmem>>, %arg3: memref<256x80xf32, #tpu.memory_space<vmem>>, %arg4: memref<1x24x80xf32, #tpu.memory_space<vmem>>) attributes {dimension_semantics = [#tpu.dimension_semantics<parallel>, #tpu.dimension_semantics<parallel>], iteration_bounds = array<i64: 2, 1>, scalar_prefetch = 0 : i64, scratch_operands = 0 : i64, tpu.core_type = #tpu.core_type<tc>, window_params = [{transform_indices = @transform_0, window_bounds = array<i64: 1, 24, 256>}, {transform_indices = @transform_1, window_bounds = array<i64: 256, 80>}, {transform_indices = @transform_2, window_bounds = array<i64: 1, 24, 80>}]} {
    %c0 = arith.constant 0 : index
    %c0_0 = arith.constant 0 : index
    %c0_1 = arith.constant 0 : index
    %0 = vector.load %arg2[%c0, %c0_0, %c0_1] : memref<1x24x256xf32, #tpu.memory_space<vmem>>, vector<1x24x256xf32>
    %1 = vector.shape_cast %0 : vector<1x24x256xf32> to vector<24x256xf32>
    %c0_2 = arith.constant 0 : index
    %c0_3 = arith.constant 0 : index
    %2 = vector.load %arg3[%c0_2, %c0_3] : memref<256x80xf32, #tpu.memory_space<vmem>>, vector<256x80xf32>
    %3 = arith.truncf %1 : vector<24x256xf32> to vector<24x256xbf16>
    %4 = arith.extf %3 : vector<24x256xbf16> to vector<24x256xf32>
    %5 = arith.subf %1, %4 : vector<24x256xf32>
    %6 = arith.truncf %5 : vector<24x256xf32> to vector<24x256xbf16>
    %7 = arith.truncf %2 : vector<256x80xf32> to vector<256x80xbf16>
    %8 = arith.extf %7 : vector<256x80xbf16> to vector<256x80xf32>
    %9 = arith.subf %2, %8 : vector<256x80xf32>
    %10 = arith.truncf %9 : vector<256x80xf32> to vector<256x80xbf16>
    %cst = arith.constant dense<0.000000e+00> : vector<24x80xf32>
    %11 = tpu.matmul %3, %7, %cst {dimension_numbers = #tpu.dot_dimension_numbers<[1], [0], [0], [1], [0, 0, 1, 1], [], []>} : vector<24x256xbf16>, vector<256x80xbf16>, vector<24x80xf32> -> vector<24x80xf32>
    %cst_4 = arith.constant dense<0.000000e+00> : vector<24x80xf32>
    %12 = tpu.matmul %3, %10, %cst_4 {dimension_numbers = #tpu.dot_dimension_numbers<[1], [0], [0], [1], [0, 0, 1, 1], [], []>} : vector<24x256xbf16>, vector<256x80xbf16>, vector<24x80xf32> -> vector<24x80xf32>
    %13 = arith.addf %11, %12 : vector<24x80xf32>
    %cst_5 = arith.constant dense<0.000000e+00> : vector<24x80xf32>
    %14 = tpu.matmul %6, %7, %cst_5 {dimension_numbers = #tpu.dot_dimension_numbers<[1], [0], [0], [1], [0, 0, 1, 1], [], []>} : vector<24x256xbf16>, vector<256x80xbf16>, vector<24x80xf32> -> vector<24x80xf32>
    %15 = arith.addf %13, %14 : vector<24x80xf32>
    %cst_6 = arith.constant 1.000000e-10 : f32
    %16 = vector.broadcast %cst_6 : f32 to vector<24x80xf32>
    %17 = arith.maximumf %15, %16 : vector<24x80xf32>
    %18 = math.log %17 : vector<24x80xf32>
    %c0_7 = arith.constant 0 : index
    %c0_8 = arith.constant 0 : index
    %c0_9 = arith.constant 0 : index
    %19 = vector.load %arg4[%c0_7, %c0_8, %c0_9] : memref<1x24x80xf32, #tpu.memory_space<vmem>>, vector<1x24x80xf32>
    %20 = vector.shape_cast %19 : vector<1x24x80xf32> to vector<24x80xf32>
    %21 = vector.shape_cast %18 : vector<24x80xf32> to vector<1x24x80xf32>
    tpu.vector_store %arg4[%c0_7, %c0_8, %c0_9], %21 {strides = array<i32>} : memref<1x24x80xf32, #tpu.memory_space<vmem>>, vector<1x24x80xf32>,
    return
  }
  func.func @transform_0(%arg0: i32, %arg1: i32) -> (i32, i32, i32) {
    %c0_i32 = arith.constant 0 : i32
    %c0_i32_0 = arith.constant 0 : i32
    return %arg0, %arg1, %c0_i32 : i32, i32, i32
  }
  func.func @transform_1(%arg0: i32, %arg1: i32) -> (i32, i32) {
    %c0_i32 = arith.constant 0 : i32
    %c0_i32_0 = arith.constant 0 : i32
    %c0_i32_1 = arith.constant 0 : i32
    return %c0_i32, %c0_i32_0 : i32, i32
  }
  func.func @transform_2(%arg0: i32, %arg1: i32) -> (i32, i32, i32) {
    %c0_i32 = arith.constant 0 : i32
    %c0_i32_0 = arith.constant 0 : i32
    return %arg0, %arg1, %c0_i32 : i32, i32, i32
  }
}

</mosaic_0001>

<llo_original>
// kernel: tpu_custom_call.1
$region0: #{tpu_custom_call.1}
  #allocation0 [shape = 'u32[]', space=smem, size = 0x4, offset = 0x4, fixed_abs, tag = 'smem constant byte address 0x4 - core index']
  #allocation1 [shape = 'u32[144,128]{1,0:T(1,128)}', space=vmem, size = 0x12000, scoped, tag = 'internal scratch']
  %s0 = inlined_call_operand.vmem [shape: f32[2,24,257], index: 0, kind: input, shape index: {}]
  %s1 = inlined_call_operand.vmem [shape: f32[257,80], index: 1, kind: input, shape index: {}]
  %s2 = inlined_call_operand.hbm [shape: f32[2,24,80], index: 2, kind: output, shape index: {}]
  %s3 = sld [smem:[#allocation0]]
  $region64: #{tpu_custom_call.1} parent=0
    _
  %s5 = ssub.s32 1, %s3
  %s6 = scalar_select 0, %s5, %s3
  $region1: #{tpu_custom_call.1} parent=0
    #allocation2 [shape = 'u8[49152]{0}', space=vmem, size = 0xc000, scoped, tag = 'input window, operand 0']
    #allocation3 [shape = 'u8[24576]{0}', space=vmem, size = 0x6000, scoped, tag = 'output window, operand 0']
    #allocation4 [shape = 's32[2]{0}', space=sflag, size = 0x8, scoped, tag = 'scoped memory for tpu_custom_call.1']
    %7 = vsyncpa [#allocation4], 0
    %s8 = scalar_lea.sflag [#allocation4], 1
    %9 = vsyncpa %s8, 0
    loop: start=0, step=1, limit=4
    $region2: #{tpu_custom_call.1} parent=1 // loop_pre_header
      _
    $region3: #{tpu_custom_call.1} parent=1 // loop_header
      %s11 = sphi 0, %s15
      %p12 = scmp.ge.s32.totalorder %s11, 4
      %s18 = sphi 0, %s30
      %s19 = sphi 0, %s26
      %s20 = sphi 0, %s18
      %s21 = sphi 0, %s19
      %s22 = sphi 0, %s20
      %s23 = sphi 0, %s21
      %s35 = sphi 0, %s37
      %s38 = sphi 0, %s35
      %s39 = sphi 0, %s38
      %s55 = sphi 0, %s39
      %s59 = sphi 0, %s59
      %s61 = sphi 0, %s59
      %s62 = sphi 0, %s61
      %s76 = sphi 0, %s62
      %s84 = sphi 0, %s86
      %s87 = sphi 0, %s84
      %s88 = sphi 0, %s87
      %s104 = sphi 0, %s88
    $region4: #{tpu_custom_call.1} parent=1 // loop_header_branch
      %14 = sbr.rel (%p12) target = $region8
    $region5: #{tpu_custom_call.1} parent=1 // loop_body
      %s16 = ssub.s32 %s11, 1
      %s17 = ssub.s32 %s11, 2
      %s24 = sadd.s32 1, %s19
      %p25 = scmp.ge.s32.totalorder %s24, 1
      %s26 = scalar_select %p25, 0, %s24
      %s27 = sadd.s32 1, %s18
      %s28 = scalar_select %p25, %s27, %s18
      %p29 = scmp.ge.s32.totalorder %s28, 2
      %s30 = scalar_select %p29, 0, %s28
      %s31 = ssub.s32 %s18, %s30
      %s32 = ssub.s32 %s19, %s26
      %s33 = sor.u32 %s31, %s32
      %p34 = scmp.eq.s32.totalorder %s33, 0
      %s36 = sadd.s32 %s35, 1
      %s37 = scalar_select %p34, %s35, %s36
      %p40 = pneg %p34
      %p41 = scmp.eq.s32.totalorder %s11, 1
      %p42 = por %p40, %p41
      %p43 = scmp.ne.s32.totalorder %s35, %s38
      %p44 = scmp.eq.s32.totalorder %s11, 0
      %p45 = por %p43, %p44
      %p46 = scmp.ne.s32.totalorder %s35, %s38
      %p47 = scmp.eq.s32.totalorder %s16, 1
      %p48 = por %p46, %p47
      %p49 = scmp.ne.s32.totalorder %s38, %s39
      %p50 = scmp.eq.s32.totalorder %s16, 0
      %p51 = por %p49, %p50
      %p52 = scmp.ne.s32.totalorder %s38, %s39
      %p53 = scmp.eq.s32.totalorder %s17, 1
      %p54 = por %p52, %p53
      %p56 = scmp.ne.s32.totalorder %s39, %s55
      %p57 = scmp.eq.s32.totalorder %s17, 0
      %p58 = por %p56, %p57
      %s60 = sadd.s32 %s59, 1
      %p63 = scmp.eq.s32.totalorder %s11, 1
      %p64 = scmp.ne.s32.totalorder %s59, %s61
      %p65 = scmp.eq.s32.totalorder %s11, 0
      %p66 = por %p64, %p65
      %p67 = scmp.ne.s32.totalorder %s59, %s61
      %p68 = scmp.eq.s32.totalorder %s16, 1
      %p69 = por %p67, %p68
      %p70 = scmp.ne.s32.totalorder %s61, %s62
      %p71 = scmp.eq.s32.totalorder %s16, 0
      %p72 = por %p70, %p71
      %p73 = scmp.ne.s32.totalorder %s61, %s62
      %p74 = scmp.eq.s32.totalorder %s17, 1
      %p75 = por %p73, %p74
      %p77 = scmp.ne.s32.totalorder %s62, %s76
      %p78 = scmp.eq.s32.totalorder %s17, 0
      %p79 = por %p77, %p78
      %s80 = ssub.s32 %s18, %s30
      %s81 = ssub.s32 %s19, %s26
      %s82 = sor.u32 %s80, %s81
      %p83 = scmp.eq.s32.totalorder %s82, 0
      %s85 = sadd.s32 %s84, 1
      %s86 = scalar_select %p83, %s84, %s85
      %p89 = pneg %p83
      %p90 = scmp.eq.s32.totalorder %s11, 1
      %p91 = por %p89, %p90
      %p92 = scmp.ne.s32.totalorder %s84, %s87
      %p93 = scmp.eq.s32.totalorder %s11, 0
      %p94 = por %p92, %p93
      %p95 = scmp.ne.s32.totalorder %s84, %s87
      %p96 = scmp.eq.s32.totalorder %s16, 1
      %p97 = por %p95, %p96
      %p98 = scmp.ne.s32.totalorder %s87, %s88
      %p99 = scmp.eq.s32.totalorder %s16, 0
      %p100 = por %p98, %p99
      %p101 = scmp.ne.s32.totalorder %s87, %s88
      %p102 = scmp.eq.s32.totalorder %s17, 1
      %p103 = por %p101, %p102
      %p105 = scmp.ne.s32.totalorder %s88, %s104
      %p106 = scmp.eq.s32.totalorder %s17, 0
      %p107 = por %p105, %p106
      %p108 = scmp.le.s32.totalorder 1, %s11
      %p109 = scmp.lt.s32.totalorder %s11, 3
      %p110 = pnand %p108, %p109
      %p111 = pneg %p110
      // Predicated region
      $region9: #{tpu_custom_call.1} parent=5 // pred_check
        _
      $region10: #{tpu_custom_call.1} parent=5 // pred_check_branch
        %113 = sbr.rel (%p110) target = $region12
      $region11: #{tpu_custom_call.1} parent=5 // pred_region
        %s114 = ssub.s32 %s11, 1
        // Predicated region
        $region13: #{tpu_custom_call.1} parent=11 // pred_check
          %p115 = pneg %p72
        $region14: #{tpu_custom_call.1} parent=11 // pred_check_branch
          %117 = sbr.rel (%p115) target = $region16
        $region15: #{tpu_custom_call.1} parent=11 // pred_region
          _
        $region16: #{tpu_custom_call.1} parent=11 // pred_fallthru
          _
      $region12: #{tpu_custom_call.1} parent=5 // pred_fallthru
        _
      %p118 = scmp.lt.s32.totalorder %s11, 2
      // Predicated region
      $region17: #{tpu_custom_call.1} parent=5 // pred_check
        %p119 = pneg %p118
      $region18: #{tpu_custom_call.1} parent=5 // pred_check_branch
        %121 = sbr.rel (%p119) target = $region20
      $region19: #{tpu_custom_call.1} parent=5 // pred_region
        // Predicated region
        $region21: #{tpu_custom_call.1} parent=19 // pred_check
          %p122 = pneg %p45
        $region22: #{tpu_custom_call.1} parent=19 // pred_check_branch
          %124 = sbr.rel (%p122) target = $region24
        $region23: #{tpu_custom_call.1} parent=19 // pred_region
          %s125 = sand.u32 %s35, 1
          %s126 = sand.u32 %s35, 1
          %s127 = smul.addr %s126, 48
          %s128 = scalar_lea.vmem [#allocation2], %s127
          %s129 = smul.u32 3, %s19
          %s130 = smul.addr %s129, 3
          %s131 = smul.addr %s18, 9
          %s132 = sadd.s32 %s130, %s131
          %s133 = smul.addr %s132, 8
          %s134 = scalar_lea.vmem %s0, %s133
          // Predicated region
          $region25: #{tpu_custom_call.1} parent=23 // pred_check
            _
          $region26: #{tpu_custom_call.1} parent=23 // pred_check_branch
            %136 = sbr.rel (0) target = $region28
          $region27: #{tpu_custom_call.1} parent=23 // pred_region
            // Predicated region
            $region29: #{tpu_custom_call.1} parent=27 // pred_check
              _
            $region30: #{tpu_custom_call.1} parent=27 // pred_check_branch
              %138 = sbr.rel (0) target = $region32
            $region31: #{tpu_custom_call.1} parent=27 // pred_region
              loop: start=0, step=1, limit=1
              $region33: #{tpu_custom_call.1} parent=31 // loop_pre_header
                _
              $region34: #{tpu_custom_call.1} parent=31 // loop_header
                %s140 = sphi 0, %s144
                %p141 = scmp.ge.s32.totalorder %s140, 1
                %s145 = sphi %s134, %s134
                %s146 = sphi %s128, %s128
              $region35: #{tpu_custom_call.1} parent=31 // loop_header_branch
                %143 = sbr.rel (%p141) target = $region39
              $region36: #{tpu_custom_call.1} parent=31 // loop_body
                %v147 = vld [vmem:[%s145] sm:$0xff]
                %148 = vst [vmem:[%s146] sm:$0xff] %v147
                %v149 = vld [vmem:[%s145 + $0x8] sm:$0xff]
                %150 = vst [vmem:[%s146 + $0x8] sm:$0xff] %v149
                %v151 = vld [vmem:[%s145 + $0x18] sm:$0xff]
                %152 = vst [vmem:[%s146 + $0x10] sm:$0xff] %v151
                %v153 = vld [vmem:[%s145 + $0x20] sm:$0xff]
                %154 = vst [vmem:[%s146 + $0x18] sm:$0xff] %v153
                %v155 = vld [vmem:[%s145 + $0x30] sm:$0xff]
                %156 = vst [vmem:[%s146 + $0x20] sm:$0xff] %v155
                %v157 = vld [vmem:[%s145 + $0x38] sm:$0xff]
                %158 = vst [vmem:[%s146 + $0x28] sm:$0xff] %v157
              $region37: #{tpu_custom_call.1} parent=31 // loop_footer
                %s144 = sadd.s32 1, %s140
              $region38: #{tpu_custom_call.1} parent=31 // loop_footer_branch
                %139 = sbr.rel target = $region34
              $region39: #{tpu_custom_call.1} parent=31 // loop_exit
                _
            $region32: #{tpu_custom_call.1} parent=27 // pred_fallthru
              _
            // Predicated region
            $region40: #{tpu_custom_call.1} parent=27 // pred_check
              _
            $region41: #{tpu_custom_call.1} parent=27 // pred_check_branch
              %160 = sbr.rel target = $region43
            $region42: #{tpu_custom_call.1} parent=27 // pred_region
              _
            $region43: #{tpu_custom_call.1} parent=27 // pred_fallthru
              _
          $region28: #{tpu_custom_call.1} parent=23 // pred_fallthru
            _
          %161 = vnop
        $region24: #{tpu_custom_call.1} parent=19 // pred_fallthru
          _
      $region20: #{tpu_custom_call.1} parent=5 // pred_fallthru
        _
      %p162 = scmp.le.s32.totalorder 1, %s11
      %p163 = scmp.lt.s32.totalorder %s11, 3
      %p164 = pnand %p162, %p163
      %p165 = pneg %p164
      // Predicated region
      $region44: #{tpu_custom_call.1} parent=5 // pred_check
        _
      $region45: #{tpu_custom_call.1} parent=5 // pred_check_branch
        %167 = sbr.rel (%p164) target = $region47
      $region46: #{tpu_custom_call.1} parent=5 // pred_region
        %s168 = ssub.s32 %s11, 1
        %s169 = sand.u32 %s38, 1
        %s170 = sand.u32 %s38, 1
        %s171 = smul.addr %s170, 48
        %s172 = scalar_lea.vmem [#allocation2], %s171
        // Predicated region
        $region48: #{tpu_custom_call.1} parent=46 // pred_check
          %p173 = pneg %p51
        $region49: #{tpu_custom_call.1} parent=46 // pred_check_branch
          %175 = sbr.rel (%p173) target = $region51
        $region50: #{tpu_custom_call.1} parent=46 // pred_region
          _
        $region51: #{tpu_custom_call.1} parent=46 // pred_fallthru
          _
        %s176 = sand.u32 %s38, 1
        %s177 = sand.u32 %s38, 1
        %s178 = smul.addr %s177, 48
        %s179 = scalar_lea.vmem [#allocation2], %s178
        %p180 = pneg %p51
        %p181 = pneg %p48
        %p182 = pneg %p72
        %p183 = pneg %p69
        %p184 = pneg %p100
        %p185 = pneg %p97
        %s186 = sand.u32 %s87, 1
        %s187 = scalar_lea.sflag [#allocation4], %s186
        %s188 = sand.u32 %s87, 1
        %s189 = smul.addr %s188, 24
        %s190 = scalar_lea.vmem [#allocation3], %s189
        %s191 = smul.u32 3, %s21
        %s192 = smul.u32 3, %s21
        %v194 = vld [vmem:[%s172] sm:$0xff]
        %v195 = vld [vmem:[%s172 + $0x8] sm:$0xff]
        %v196 = vld [vmem:[%s172 + $0x10] sm:$0xff]
        %v197 = vld [vmem:[%s172 + $0x18] sm:$0xff]
        %v198 = vld [vmem:[%s172 + $0x20] sm:$0xff]
        %v199 = vld [vmem:[%s172 + $0x28] sm:$0xff]
        %v200 = vld [vmem:[%s1] sm:$0xff]
        %v201 = vld [vmem:[%s1 + $0x8] sm:$0xff]
        %v202 = vld [vmem:[%s1 + $0x10] sm:$0xff]
        %v203 = vld [vmem:[%s1 + $0x18] sm:$0xff]
        %v204 = vld [vmem:[%s1 + $0x20] sm:$0xff]
        %v205 = vld [vmem:[%s1 + $0x28] sm:$0xff]
        %v206 = vld [vmem:[%s1 + $0x30] sm:$0xff]
        %v207 = vld [vmem:[%s1 + $0x38] sm:$0xff]
        %v208 = vld [vmem:[%s1 + $0x40] sm:$0xff]
        %v209 = vld [vmem:[%s1 + $0x48] sm:$0xff]
        %v210 = vld [vmem:[%s1 + $0x50] sm:$0xff]
        %v211 = vld [vmem:[%s1 + $0x58] sm:$0xff]
        %v212 = vld [vmem:[%s1 + $0x60] sm:$0xff]
        %v213 = vld [vmem:[%s1 + $0x68] sm:$0xff]
        %v214 = vld [vmem:[%s1 + $0x70] sm:$0xff]
        %v215 = vld [vmem:[%s1 + $0x78] sm:$0xff]
        %v216 = vld [vmem:[%s1 + $0x80] sm:$0xff]
        %v217 = vld [vmem:[%s1 + $0x88] sm:$0xff]
        %v218 = vld [vmem:[%s1 + $0x90] sm:$0xff]
        %v219 = vld [vmem:[%s1 + $0x98] sm:$0xff]
        %v220 = vld [vmem:[%s1 + $0xa0] sm:$0xff]
        %v221 = vld [vmem:[%s1 + $0xa8] sm:$0xff]
        %v222 = vld [vmem:[%s1 + $0xb0] sm:$0xff]
        %v223 = vld [vmem:[%s1 + $0xb8] sm:$0xff]
        %v224 = vld [vmem:[%s1 + $0xc0] sm:$0xff]
        %v225 = vld [vmem:[%s1 + $0xc8] sm:$0xff]
        %v226 = vld [vmem:[%s1 + $0xd0] sm:$0xff]
        %v227 = vld [vmem:[%s1 + $0xd8] sm:$0xff]
        %v228 = vld [vmem:[%s1 + $0xe0] sm:$0xff]
        %v229 = vld [vmem:[%s1 + $0xe8] sm:$0xff]
        %v230 = vld [vmem:[%s1 + $0xf0] sm:$0xff]
        %v231 = vld [vmem:[%s1 + $0xf8] sm:$0xff]
        %v232 = vpack.c.bf16 %v196, %v194
        %v233 = vpack.c.bf16 %v197, %v195
        %v234 = vpack.c.bf16 %v198, %v198
        %v235 = vpack.c.bf16 %v199, %v199
        %v236 = vunpack.c.l.bf16 %v232
        %v237 = vunpack.c.l.bf16 %v233
        %v238 = vunpack.c.h.bf16 %v232
        %v239 = vunpack.c.h.bf16 %v233
        %v240 = vunpack.c.l.bf16 %v234
        %v241 = vunpack.c.l.bf16 %v235
        %v242 = vsub.f32 %v194, %v236
        %v243 = vsub.f32 %v195, %v237
        %v244 = vsub.f32 %v196, %v238
        %v245 = vsub.f32 %v197, %v239
        %v246 = vsub.f32 %v198, %v240
        %v247 = vsub.f32 %v199, %v241
        %v248 = vpack.c.bf16 %v244, %v242
        %v249 = vpack.c.bf16 %v245, %v243
        %v250 = vpack.c.bf16 %v246, %v246
        %v251 = vpack.c.bf16 %v247, %v247
        %v252 = vpack.c.bf16 %v201, %v200
        %v253 = vpack.c.bf16 %v203, %v202
        %v254 = vpack.c.bf16 %v205, %v204
        %v255 = vpack.c.bf16 %v207, %v206
        %v256 = vpack.c.bf16 %v209, %v208
        %v257 = vpack.c.bf16 %v211, %v210
        %v258 = vpack.c.bf16 %v213, %v212
        %v259 = vpack.c.bf16 %v215, %v214
        %v260 = vpack.c.bf16 %v217, %v216
        %v261 = vpack.c.bf16 %v219, %v218
        %v262 = vpack.c.bf16 %v221, %v220
        %v263 = vpack.c.bf16 %v223, %v222
        %v264 = vpack.c.bf16 %v225, %v224
        %v265 = vpack.c.bf16 %v227, %v226
        %v266 = vpack.c.bf16 %v229, %v228
        %v267 = vpack.c.bf16 %v231, %v230
        %v268 = vunpack.c.l.bf16 %v252
        %v269 = vunpack.c.h.bf16 %v252
        %v270 = vunpack.c.l.bf16 %v253
        %v271 = vunpack.c.h.bf16 %v253
        %v272 = vunpack.c.l.bf16 %v254
        %v273 = vunpack.c.h.bf16 %v254
        %v274 = vunpack.c.l.bf16 %v255
        %v275 = vunpack.c.h.bf16 %v255
        %v276 = vunpack.c.l.bf16 %v256
        %v277 = vunpack.c.h.bf16 %v256
        %v278 = vunpack.c.l.bf16 %v257
        %v279 = vunpack.c.h.bf16 %v257
        %v280 = vunpack.c.l.bf16 %v258
        %v281 = vunpack.c.h.bf16 %v258
        %v282 = vunpack.c.l.bf16 %v259
        %v283 = vunpack.c.h.bf16 %v259
        %v284 = vunpack.c.l.bf16 %v260
        %v285 = vunpack.c.h.bf16 %v260
        %v286 = vunpack.c.l.bf16 %v261
        %v287 = vunpack.c.h.bf16 %v261
        %v288 = vunpack.c.l.bf16 %v262
        %v289 = vunpack.c.h.bf16 %v262
        %v290 = vunpack.c.l.bf16 %v263
        %v291 = vunpack.c.h.bf16 %v263
        %v292 = vunpack.c.l.bf16 %v264
        %v293 = vunpack.c.h.bf16 %v264
        %v294 = vunpack.c.l.bf16 %v265
        %v295 = vunpack.c.h.bf16 %v265
        %v296 = vunpack.c.l.bf16 %v266
        %v297 = vunpack.c.h.bf16 %v266
        %v298 = vunpack.c.l.bf16 %v267
        %v299 = vunpack.c.h.bf16 %v267
        %v300 = vsub.f32 %v200, %v268
        %v301 = vsub.f32 %v201, %v269
        %v302 = vsub.f32 %v202, %v270
        %v303 = vsub.f32 %v203, %v271
        %v304 = vsub.f32 %v204, %v272
        %v305 = vsub.f32 %v205, %v273
        %v306 = vsub.f32 %v206, %v274
        %v307 = vsub.f32 %v207, %v275
        %v308 = vsub.f32 %v208, %v276
        %v309 = vsub.f32 %v209, %v277
        %v310 = vsub.f32 %v210, %v278
        %v311 = vsub.f32 %v211, %v279
        %v312 = vsub.f32 %v212, %v280
        %v313 = vsub.f32 %v213, %v281
        %v314 = vsub.f32 %v214, %v282
        %v315 = vsub.f32 %v215, %v283
        %v316 = vsub.f32 %v216, %v284
        %v317 = vsub.f32 %v217, %v285
        %v318 = vsub.f32 %v218, %v286
        %v319 = vsub.f32 %v219, %v287
        %v320 = vsub.f32 %v220, %v288
        %v321 = vsub.f32 %v221, %v289
        %v322 = vsub.f32 %v222, %v290
        %v323 = vsub.f32 %v223, %v291
        %v324 = vsub.f32 %v224, %v292
        %v325 = vsub.f32 %v225, %v293
        %v326 = vsub.f32 %v226, %v294
        %v327 = vsub.f32 %v227, %v295
        %v328 = vsub.f32 %v228, %v296
        %v329 = vsub.f32 %v229, %v297
        %v330 = vsub.f32 %v230, %v298
        %v331 = vsub.f32 %v231, %v299
        %v332 = vpack.c.bf16 %v301, %v300
        %v333 = vpack.c.bf16 %v303, %v302
        %v334 = vpack.c.bf16 %v305, %v304
        %v335 = vpack.c.bf16 %v307, %v306
        %v336 = vpack.c.bf16 %v309, %v308
        %v337 = vpack.c.bf16 %v311, %v310
        %v338 = vpack.c.bf16 %v313, %v312
        %v339 = vpack.c.bf16 %v315, %v314
        %v340 = vpack.c.bf16 %v317, %v316
        %v341 = vpack.c.bf16 %v319, %v318
        %v342 = vpack.c.bf16 %v321, %v320
        %v343 = vpack.c.bf16 %v323, %v322
        %v344 = vpack.c.bf16 %v325, %v324
        %v345 = vpack.c.bf16 %v327, %v326
        %v346 = vpack.c.bf16 %v329, %v328
        %v347 = vpack.c.bf16 %v331, %v330
        %348 = vmatprep.subr.bf16.mxu0 0
        %349 = vmatpush1.bf16.msra.mxu0 %v332
        %350 = vmatprep.subr.bf16.mxu0 0
        %351 = vmatpush1.bf16.msra.mxu0 %v333
        %352 = vmatprep.subr.bf16.mxu0 0
        %353 = vmatpush1.bf16.msra.mxu0 %v334
        %354 = vmatprep.subr.bf16.mxu0 0
        %355 = vmatpush1.bf16.msra.mxu0 %v335
        %356 = vmatprep.subr.bf16.mxu0 0
        %357 = vmatpush1.bf16.msra.mxu0 %v336
        %358 = vmatprep.subr.bf16.mxu0 0
        %359 = vmatpush1.bf16.msra.mxu0 %v337
        %360 = vmatprep.subr.bf16.mxu0 0
        %361 = vmatpush1.bf16.msra.mxu0 %v338
        %362 = vmatprep.subr.bf16.mxu0 0
        %363 = vmatpush1.bf16.msra.mxu0 %v339
        %364 = vmatprep.subr.bf16.mxu0 0
        %365 = vmatpush1.bf16.msra.mxu0 %v340
        %366 = vmatprep.subr.bf16.mxu0 0
        %367 = vmatpush1.bf16.msra.mxu0 %v341
        %368 = vmatprep.subr.bf16.mxu0 0
        %369 = vmatpush1.bf16.msra.mxu0 %v342
        %370 = vmatprep.subr.bf16.mxu0 0
        %371 = vmatpush1.bf16.msra.mxu0 %v343
        %372 = vmatprep.subr.bf16.mxu0 0
        %373 = vmatpush1.bf16.msra.mxu0 %v344
        %374 = vmatprep.subr.bf16.mxu0 0
        %375 = vmatpush1.bf16.msra.mxu0 %v345
        %376 = vmatprep.subr.bf16.mxu0 0
        %377 = vmatpush1.bf16.msra.mxu0 %v346
        %378 = vmatprep.subr.bf16.mxu0 0
        %379 = vmatpush1.bf16.msra.mxu0 %v347
        %380 = vmatprep.mubr.bf16.mxu0 %v233
        %381 = vmatmul.mubr.bf16.gmra.mrb[0].mxu0 %v232
        %v382 = vpop.f32.mrb[0].mxu0
        %v383 = vadd.f32 0.0, %v382
        %v384 = vpop.f32.mrb[0].mxu0
        %v385 = vpop.f32.mrb[0].mxu0
        %v386 = vadd.f32 0.0, %v385
        %v387 = vpop.f32.mrb[0].mxu0
        %388 = vmatprep.mubr.bf16.mxu0 %v235
        %389 = vmatmul.mubr.bf16.gmra.mrb[0].mxu0 %v234
        %v390 = vpop.f32.mrb[0].mxu0
        %v391 = vadd.f32 0.0, %v390
        %v392 = vpop.f32.mrb[0].mxu0
        %v393 = vpop.f32.mrb[0].mxu0
        %v394 = vpop.f32.mrb[0].mxu0
        %395 = vdwg.mxu0
        %396 = vmatprep.subr.bf16.mxu0 0
        %397 = vmatpush1.bf16.msra.mxu0 %v252
        %398 = vmatprep.subr.bf16.mxu0 0
        %399 = vmatpush1.bf16.msra.mxu0 %v253
        %400 = vmatprep.subr.bf16.mxu0 0
        %401 = vmatpush1.bf16.msra.mxu0 %v254
        %402 = vmatprep.subr.bf16.mxu0 0
        %403 = vmatpush1.bf16.msra.mxu0 %v255
        %404 = vmatprep.subr.bf16.mxu0 0
        %405 = vmatpush1.bf16.msra.mxu0 %v256
        %406 = vmatprep.subr.bf16.mxu0 0
        %407 = vmatpush1.bf16.msra.mxu0 %v257
        %408 = vmatprep.subr.bf16.mxu0 0
        %409 = vmatpush1.bf16.msra.mxu0 %v258
        %410 = vmatprep.subr.bf16.mxu0 0
        %411 = vmatpush1.bf16.msra.mxu0 %v259
        %412 = vmatprep.subr.bf16.mxu0 0
        %413 = vmatpush1.bf16.msra.mxu0 %v260
        %414 = vmatprep.subr.bf16.mxu0 0
        %415 = vmatpush1.bf16.msra.mxu0 %v261
        %416 = vmatprep.subr.bf16.mxu0 0
        %417 = vmatpush1.bf16.msra.mxu0 %v262
        %418 = vmatprep.subr.bf16.mxu0 0
        %419 = vmatpush1.bf16.msra.mxu0 %v263
        %420 = vmatprep.subr.bf16.mxu0 0
        %421 = vmatpush1.bf16.msra.mxu0 %v264
        %422 = vmatprep.subr.bf16.mxu0 0
        %423 = vmatpush1.bf16.msra.mxu0 %v265
        %424 = vmatprep.subr.bf16.mxu0 0
        %425 = vmatpush1.bf16.msra.mxu0 %v266
        %426 = vmatprep.subr.bf16.mxu0 0
        %427 = vmatpush1.bf16.msra.mxu0 %v267
        %428 = vmatprep.mubr.bf16.mxu0 %v233
        %429 = vmatmul.mubr.bf16.gmra.mrb[0].mxu0 %v232
        %v430 = vpop.f32.mrb[0].mxu0
        %v431 = vadd.f32 %v383, %v430
        %v432 = vpop.f32.mrb[0].mxu0
        %v433 = vpop.f32.mrb[0].mxu0
        %v434 = vadd.f32 %v386, %v433
        %v435 = vpop.f32.mrb[0].mxu0
        %436 = vmatprep.mubr.bf16.mxu0 %v235
        %437 = vmatmul.mubr.bf16.gmra.mrb[0].mxu0 %v234
        %v438 = vpop.f32.mrb[0].mxu0
        %v439 = vadd.f32 %v391, %v438
        %v440 = vpop.f32.mrb[0].mxu0
        %v441 = vpop.f32.mrb[0].mxu0
        %v442 = vpop.f32.mrb[0].mxu0
        %443 = vdwg.mxu0
        %444 = vmatprep.subr.bf16.mxu0 0
        %445 = vmatpush1.bf16.msra.mxu0 %v252
        %446 = vmatprep.subr.bf16.mxu0 0
        %447 = vmatpush1.bf16.msra.mxu0 %v253
        %448 = vmatprep.subr.bf16.mxu0 0
        %449 = vmatpush1.bf16.msra.mxu0 %v254
        %450 = vmatprep.subr.bf16.mxu0 0
        %451 = vmatpush1.bf16.msra.mxu0 %v255
        %452 = vmatprep.subr.bf16.mxu0 0
        %453 = vmatpush1.bf16.msra.mxu0 %v256
        %454 = vmatprep.subr.bf16.mxu0 0
        %455 = vmatpush1.bf16.msra.mxu0 %v257
        %456 = vmatprep.subr.bf16.mxu0 0
        %457 = vmatpush1.bf16.msra.mxu0 %v258
        %458 = vmatprep.subr.bf16.mxu0 0
        %459 = vmatpush1.bf16.msra.mxu0 %v259
        %460 = vmatprep.subr.bf16.mxu0 0
        %461 = vmatpush1.bf16.msra.mxu0 %v260
        %462 = vmatprep.subr.bf16.mxu0 0
        %463 = vmatpush1.bf16.msra.mxu0 %v261
        %464 = vmatprep.subr.bf16.mxu0 0
        %465 = vmatpush1.bf16.msra.mxu0 %v262
        %466 = vmatprep.subr.bf16.mxu0 0
        %467 = vmatpush1.bf16.msra.mxu0 %v263
        %468 = vmatprep.subr.bf16.mxu0 0
        %469 = vmatpush1.bf16.msra.mxu0 %v264
        %470 = vmatprep.subr.bf16.mxu0 0
        %471 = vmatpush1.bf16.msra.mxu0 %v265
        %472 = vmatprep.subr.bf16.mxu0 0
        %473 = vmatpush1.bf16.msra.mxu0 %v266
        %474 = vmatprep.subr.bf16.mxu0 0
        %475 = vmatpush1.bf16.msra.mxu0 %v267
        %476 = vmatprep.mubr.bf16.mxu0 %v249
        %477 = vmatmul.mubr.bf16.gmra.mrb[0].mxu0 %v248
        %v478 = vpop.f32.mrb[0].mxu0
        %v479 = vadd.f32 0.0, %v478
        %v480 = vpop.f32.mrb[0].mxu0
        %v481 = vpop.f32.mrb[0].mxu0
        %v482 = vadd.f32 0.0, %v481
        %v483 = vpop.f32.mrb[0].mxu0
        %484 = vmatprep.mubr.bf16.mxu0 %v251
        %485 = vmatmul.mubr.bf16.gmra.mrb[0].mxu0 %v250
        %v486 = vpop.f32.mrb[0].mxu0
        %v487 = vadd.f32 0.0, %v486
        %v488 = vpop.f32.mrb[0].mxu0
        %v489 = vpop.f32.mrb[0].mxu0
        %v490 = vpop.f32.mrb[0].mxu0
        %491 = vdwg.mxu0
        %v492 = vadd.f32 %v431, %v479
        %v493 = vadd.f32 %v434, %v482
        %v494 = vadd.f32 %v439, %v487
        %v495 = vmax.f32 %v492, 1e-10
        %v496 = vmax.f32 %v493, 1e-10
        %v497 = vmax.f32 %v494, 1e-10
        %v498 = vlog2.pop %v495
        %v499 = vmul.f32 %v498, 0.6931472
        %v500 = vlog2.pop %v496
        %v501 = vmul.f32 %v500, 0.6931472
        %v502 = vlog2.pop %v497
        %v503 = vmul.f32 %v502, 0.6931472
        %vm504 = vcmask 654336
        %505 = vst.msk [vmem:[%s190] sm:$0xff] %vm504, %v499
        %506 = vst.msk [vmem:[%s190 + $0x8] sm:$0xff] %vm504, %v501
        %507 = vst.msk [vmem:[%s190 + $0x10] sm:$0xff] %vm504, %v503
        %s508 = sand.u32 %s87, 1
        %s509 = scalar_lea.sflag [#allocation4], %s508
        %s510 = sand.u32 %s87, 1
        %s511 = smul.addr %s510, 24
        %s512 = scalar_lea.vmem [#allocation3], %s511
        // Predicated region
        $region52: #{tpu_custom_call.1} parent=46 // pred_check
          %p513 = pneg %p97
        $region53: #{tpu_custom_call.1} parent=46 // pred_check_branch
          %515 = sbr.rel (%p513) target = $region55
        $region54: #{tpu_custom_call.1} parent=46 // pred_region
          %s516 = smul.u32 3, %s21
          %s518 = ssub.s32 384, 384
          %519 = vsyncadd %s509, %s518
          %s520 = smul.addr %s20, 3
          %s521 = sadd.s32 %s516, %s520
          %s522 = smul.addr %s521, 128
          %s523 = scalar_lea.hbm %s2, %s522
          %s524 = sshll.u32 %s512, 4
          %s525 = int_to_ptr.vmem [resolvable:$true] %s524
          %530 = dma.vmem_to_hbm [thread:$0]  %s525, 384, %s523, %s509, 128, 128, 8
        $region55: #{tpu_custom_call.1} parent=46 // pred_fallthru
          _
      $region47: #{tpu_custom_call.1} parent=5 // pred_fallthru
        _
      %p531 = scmp.le.s32.totalorder 2, %s11
      // Predicated region
      $region56: #{tpu_custom_call.1} parent=5 // pred_check
        %p532 = pneg %p531
      $region57: #{tpu_custom_call.1} parent=5 // pred_check_branch
        %534 = sbr.rel (%p532) target = $region59
      $region58: #{tpu_custom_call.1} parent=5 // pred_region
        %s535 = ssub.s32 %s11, 2
        // Predicated region
        $region60: #{tpu_custom_call.1} parent=58 // pred_check
          %p536 = pneg %p103
        $region61: #{tpu_custom_call.1} parent=58 // pred_check_branch
          %538 = sbr.rel (%p536) target = $region63
        $region62: #{tpu_custom_call.1} parent=58 // pred_region
          %s539 = sand.u32 %s88, 1
          %s540 = scalar_lea.sflag [#allocation4], %s539
          %s541 = sand.u32 %s88, 1
          %s542 = smul.addr %s541, 24
          %s543 = scalar_lea.vmem [#allocation3], %s542
          %544 = dma.done %s540, 384
        $region63: #{tpu_custom_call.1} parent=58 // pred_fallthru
          _
      $region59: #{tpu_custom_call.1} parent=5 // pred_fallthru
        _
    $region6: #{tpu_custom_call.1} parent=1 // loop_footer
      %s15 = sadd.s32 1, %s11
    $region7: #{tpu_custom_call.1} parent=1 // loop_footer_branch
      %10 = sbr.rel target = $region3
    $region8: #{tpu_custom_call.1} parent=1 // loop_exit
      _
    %545 = vsyncpa [#allocation4], 1
    %s546 = scalar_lea.sflag [#allocation4], 1
    %547 = vsyncpa %s546, 1

</llo_original>
